<compile_context>
chip_gen: v7x
topology: tpu7x:2x2x1
jax: 0.10.0
libtpu: 0.0.40
codegen_flags: <defaults>
</compile_context>

<pallas_src>
import functools

import jax
import jax.numpy as jnp
import numpy as np
from jax.experimental import pallas as pl
from jax.experimental.pallas import tpu as pltpu

# ----------------------------------------------------------------------------------
# Deterministic stand-ins for CRISIS_LABELS / CRISIS_TYPE_WEIGHTS used by the module.
# ----------------------------------------------------------------------------------
CRISIS_LABELS = [
    "requests_or_urgent_needs",
    "infrastructure_and_utility_damage",
    "injured_or_dead_people",
    "displaced_people_and_evacuations",
    "not_humanitarian",
    "other_relevant_information",
]
CRISIS_TYPE_WEIGHTS = {
    "requests_or_urgent_needs": 2.0,
    "infrastructure_and_utility_damage": 1.5,
    "injured_or_dead_people": 1.8,
    "displaced_people_and_evacuations": 1.3,
    "not_humanitarian": 0.8,
    "other_relevant_information": 1.0,
}
NUM_CLASSES = len(CRISIS_LABELS)

# EnsembleTrainingConfig defaults used by the forward pass.
HUMANITARIAN_BOOST = 1.2
CRITICAL_CRISIS_WEIGHT = 2.0
INITIAL_TEMPERATURE = 3.0       # temperature_scaling=True -> nn.Parameter(3.0)
DIVERSITY_REG_INIT = 0.1        # nn.Parameter(0.1)

MAX_LANE_TILE = 2048            # batch lanes per grid step for large batches


# ----------------------------------------------------------------------------------
# Kernel helpers (traced inside the kernel body).
# ----------------------------------------------------------------------------------
def _log_softmax_ax0(x):
    # log-softmax over the class axis (sublanes) of a (C, TL) block.
    m = jnp.max(x, axis=0, keepdims=True)
    z = x - m
    return z - jnp.log(jnp.sum(jnp.exp(z), axis=0, keepdims=True))


def _binary_ce(logit0, logit1, tgt):
    # logit0 / logit1 / tgt: (1, TL).  Per-example cross-entropy over the stacked
    # 2-class logits (matches F.cross_entropy(torch.stack([l0, l1], dim=1), tgt,
    # reduction='none')); the mean over the global batch is taken by the caller.
    mx = jnp.maximum(logit0, logit1)
    lse = mx + jnp.log(jnp.exp(logit0 - mx) + jnp.exp(logit1 - mx))
    return -(tgt * (logit1 - lse) + (1.0 - tgt) * (logit0 - lse))      # (1, TL)


def crisis_loss_kernel(temp_ref, dreg_ref, pred_ref, tgt_ref, cw_ref, indiv_ref,
                       out_ref, *, batch_size, tiles_per_core, num_models,
                       num_classes):
    core = pl.program_id(0)                 # "parallel" axis: per-TensorCore batch split
    step = pl.program_id(1)                 # "arbitrary" axis: reduction over batch tiles
    tile = core * tiles_per_core + step     # logical batch-tile id (may be OOB; masked)

    @pl.when(step == 0)
    def _init():
        out_ref[...] = jnp.zeros_like(out_ref)

    temp = temp_ref[0, 0]                   # temperature (SMEM scalar)
    dreg = dreg_ref[0, 0]                   # diversity_regularization (SMEM scalar)
    inv_temp = 1.0 / temp                   # one scalar reciprocal; multiplies on the VPU

    C = num_classes
    M = num_models

    # Native-dtype DMA; upcast to f32 immediately after load (bf16-safe on v5e too).
    preds = pred_ref[...].astype(jnp.float32)         # (C, TL) lane-dense: batch on lanes
    tl = preds.shape[1]
    tgt = tgt_ref[...]                                 # (1, TL) int32 class indices
    cw = cw_ref[...].astype(jnp.float32)               # (C, 1)  crisis weights

    # Tail / OOB-tile mask: global example index < batch_size.
    lane_ids = jax.lax.broadcasted_iota(jnp.int32, (1, tl), 1)
    valid = (tile * tl + lane_ids) < batch_size        # (1, TL) bool
    validf = valid.astype(jnp.float32)

    # Zero padded lanes so exp/log stay finite; their contributions are masked below.
    preds = jnp.where(valid, preds, 0.0)
    tgt = jnp.where(valid, tgt, 0)

    # One-hot built in-kernel (cheap iota + compare; no (B, C) one-hot HBM input).
    class_ids = jax.lax.broadcasted_iota(jnp.int32, (C, tl), 0)
    onehot = (class_ids == tgt).astype(jnp.float32)    # (C, TL)

    # --- _weighted_cross_entropy: temperature-scaled, class-weighted CE (batch sum) ---
    logp = _log_softmax_ax0(preds * inv_temp)                          # (C, TL)
    nll = -jnp.sum(onehot * logp, axis=0, keepdims=True)               # (1, TL)
    batch_w = jnp.sum(onehot * cw, axis=0, keepdims=True)              # (1, TL)
    base_sum = jnp.sum(nll * batch_w * validf, keepdims=True)          # (1, 1)

    # --- _humanitarian_priority_loss: binary CE over summed logits (batch sum) ---
    hum_logit = jnp.sum(preds[0:4, :], axis=0, keepdims=True)          # (1, TL)
    nonhum_logit = jnp.sum(preds[4:6, :], axis=0, keepdims=True)       # (1, TL)
    hum_tgt = jnp.sum(onehot[0:4, :], axis=0, keepdims=True)           # 1.0 if target in {0..3}
    hum_sum = jnp.sum(_binary_ce(nonhum_logit, hum_logit, hum_tgt) * validf,
                      keepdims=True)                                   # (1, 1)

    # --- _critical_crisis_loss (batch sum) ---
    crit_logit = preds[0:1, :] + preds[2:3, :]                         # (1, TL)
    noncrit_logit = 1.0 - crit_logit
    crit_tgt = onehot[0:1, :] + onehot[2:3, :]                         # 1.0 if target in {0, 2}
    crit_sum = jnp.sum(_binary_ce(noncrit_logit, crit_logit, crit_tgt) * validf,
                       keepdims=True)                                  # (1, 1)

    partial = (base_sum
               + HUMANITARIAN_BOOST * hum_sum
               + CRITICAL_CRISIS_WEIGHT * crit_sum)

    # --- _diversity_regularization_loss: mean pairwise KL(p_j || softmax(pred_i)) ---
    # O(M) algebraic form of sum_{i<j} KL(p_j || p_i):
    #   sum_j j * sum_c p_j*lp_j  -  sum_i sum_c lp_i * (sum_{j>i} p_j)
    # One log-softmax + exp per model and one suffix-sum carry; no O(M^2) pair loop.
    if M >= 2:
        indiv = indiv_ref[...].astype(jnp.float32)                     # (M*C, TL)
        indiv = jnp.where(valid, indiv, 0.0)
        kl = jnp.zeros((1, tl), jnp.float32)
        suffix = jnp.zeros((C, tl), jnp.float32)                       # sum_{j>m} p_j
        for m in range(M - 1, -1, -1):
            lp_m = _log_softmax_ax0(indiv[m * C:(m + 1) * C, :])       # (C, TL)
            p_m = jnp.exp(lp_m)
            if m > 0:
                kl = kl + float(m) * jnp.sum(p_m * lp_m, axis=0, keepdims=True)
            if m < M - 1:
                kl = kl - jnp.sum(lp_m * suffix, axis=0, keepdims=True)
            if m > 0:
                suffix = suffix + p_m
        n_pairs = M * (M - 1) // 2
        kl_sum = jnp.sum(kl * validf, keepdims=True)                   # (1, 1)
        # total += 0.1 * (-avg_kl * dreg); avg_kl = (kl_sum / n_pairs) / B,
        # the single 1/B normalization is applied once in the wrapper.
        partial = partial - (0.1 / n_pairs) * dreg * kl_sum

    out_ref[...] += partial


# ----------------------------------------------------------------------------------
# Wrapper: lane-dense layout, fixed masked lane tile, 2-way "parallel" core split.
# ----------------------------------------------------------------------------------
@jax.jit
def crisis_adaptive_loss(predictions, targets, individual_predictions,
                         temperature, diversity_reg, crisis_weights):
    B, C = predictions.shape
    M = individual_predictions.shape[1]

    # Batch-on-lanes layout: one wrapper transpose per tensor ((B,M,C)->(B,M*C) is a
    # free contiguous reshape).  Native dtype kept; kernel upcasts after the DMA.
    preds_t = jnp.transpose(predictions)                                       # (C, B)
    indiv_t = jnp.transpose(jnp.reshape(individual_predictions, (B, M * C)))   # (M*C, B)
    tgt = jnp.reshape(targets, (1, B)).astype(jnp.int32)                       # (1, B)
    cw = jnp.reshape(crisis_weights, (C, 1))                                   # (C, 1)
    temp = jnp.reshape(jnp.asarray(temperature, jnp.float32), (1, 1))
    dreg = jnp.reshape(jnp.asarray(diversity_reg, jnp.float32), (1, 1))

    # Fixed lane tile with a masked tail: no power-of-two-divisor scan, no tb=B
    # VMEM blow-up.  Per-tile VMEM in this layout is tiny (<1 MiB at 2048 lanes),
    # so it fits every generation's scoped-VMEM default while staying pipelined.
    tl = B if B <= MAX_LANE_TILE else MAX_LANE_TILE
    nblocks = pl.cdiv(B, tl)
    tiles_per_core = pl.cdiv(nblocks, 2)    # leading size-2 "parallel" axis (v7x: 2 TCs)
    last_block = nblocks - 1

    def tile_map(c, t):
        # Clamp OOB tiles (odd tile counts) to the last real block; the kernel masks
        # their contribution to zero via the global-row test.
        return (0, jnp.minimum(c * tiles_per_core + t, last_block))

    kernel = functools.partial(
        crisis_loss_kernel, batch_size=B, tiles_per_core=tiles_per_core,
        num_models=M, num_classes=C)

    itemsize = jnp.dtype(predictions.dtype).itemsize
    cost = pl.CostEstimate(
        flops=int(B * (10 * C + 8 * M * C + 48)),
        transcendentals=int(B * (2 * M * C + C + 6)),
        bytes_accessed=int(B * (C + M * C) * itemsize + B * 4 + 4 * (C + 4)))

    partials = pl.pallas_call(
        kernel,
        out_shape=jax.ShapeDtypeStruct((2, 1, 1), jnp.float32),
        grid=(2, tiles_per_core),
        in_specs=[
            pl.BlockSpec(memory_space=pltpu.MemorySpace.SMEM),      # temperature
            pl.BlockSpec(memory_space=pltpu.MemorySpace.SMEM),      # diversity reg
            pl.BlockSpec((C, tl), tile_map),                        # predictions  (C, B)
            pl.BlockSpec((1, tl), tile_map),                        # int32 targets (1, B)
            pl.BlockSpec((C, 1), lambda c, t: (0, 0)),              # crisis weights
            pl.BlockSpec((M * C, tl), tile_map),                    # individual preds (M*C, B)
        ],
        out_specs=pl.BlockSpec((1, 1, 1), lambda c, t: (c, 0, 0)),  # per-core partial sums
        compiler_params=pltpu.CompilerParams(
            dimension_semantics=("parallel", "arbitrary")),
        cost_estimate=cost,
    )(temp, dreg, preds_t, tgt, cw, indiv_t)

    # Sum the two per-core partials and apply the single 1/B normalization.
    return jnp.sum(partials) / B


# ----------------------------------------------------------------------------------
# Pure-JAX reference mirroring the PyTorch semantics (for correctness check).
# ----------------------------------------------------------------------------------
def crisis_adaptive_loss_ref(predictions, targets, individual_predictions,
                             temperature, diversity_reg, crisis_weights):
    B, C = predictions.shape
    scaled = predictions / temperature
    logp = jax.nn.log_softmax(scaled, axis=-1)
    nll = -jnp.take_along_axis(logp, targets[:, None], axis=-1)[:, 0]
    bw = crisis_weights[targets]
    base = jnp.mean(nll * bw)

    def _isin(t, vals):
        return (t[:, None] == jnp.asarray(vals)[None, :]).any(axis=-1)

    hum = predictions[:, 0:4].sum(-1)
    nonhum = predictions[:, 4:6].sum(-1)
    hum_t = _isin(targets, [0, 1, 2, 3]).astype(jnp.int32)
    bl = jnp.stack([nonhum, hum], axis=1)
    hum_loss = jnp.mean(-jax.nn.log_softmax(bl, -1)[jnp.arange(B), hum_t])

    crit = predictions[:, 0] + predictions[:, 2]
    noncrit = 1.0 - crit
    crit_t = _isin(targets, [0, 2]).astype(jnp.int32)
    bl2 = jnp.stack([noncrit, crit], axis=1)
    crit_loss = jnp.mean(-jax.nn.log_softmax(bl2, -1)[jnp.arange(B), crit_t])

    _, M, _ = individual_predictions.shape
    kls = []
    for i in range(M):
        for j in range(i + 1, M):
            lpi = jax.nn.log_softmax(individual_predictions[:, i], -1)
            pj = jax.nn.softmax(individual_predictions[:, j], -1)
            kls.append(jnp.sum(pj * (jnp.log(pj) - lpi)) / B)
    avg_kl = jnp.mean(jnp.stack(kls))
    div = -avg_kl * diversity_reg
    return (base + HUMANITARIAN_BOOST * hum_loss
            + CRITICAL_CRISIS_WEIGHT * crit_loss + 0.1 * div)


if __name__ == "__main__":
    key = jax.random.PRNGKey(0)
    crisis_weights = jnp.array([CRISIS_TYPE_WEIGHTS[l] for l in CRISIS_LABELS],
                               dtype=jnp.float32)
    temperature = jnp.float32(INITIAL_TEMPERATURE)
    diversity_reg = jnp.float32(DIVERSITY_REG_INIT)

    # Small deterministic checks (B, M) variants; C fixed by the module.
    for B, M in ((8, 3), (20, 4)):
        k1, k2, k3, key = jax.random.split(key, 4)
        predictions = jax.random.normal(k1, (B, NUM_CLASSES), dtype=jnp.float32)
        individual_predictions = jax.random.normal(k2, (B, M, NUM_CLASSES),
                                                    dtype=jnp.float32)
        targets = jax.random.randint(k3, (B,), 0, NUM_CLASSES, dtype=jnp.int32)

        loss = crisis_adaptive_loss(predictions, targets, individual_predictions,
                                    temperature, diversity_reg, crisis_weights)
        loss = jax.block_until_ready(loss)

        ref = crisis_adaptive_loss_ref(predictions, targets, individual_predictions,
                                       temperature, diversity_reg, crisis_weights)
        assert np.allclose(np.asarray(loss), np.asarray(ref), rtol=1e-4, atol=1e-4), \
            (B, M, float(loss), float(ref))

    print("KERNEL_OK")
</pallas_src>

<mosaic_0001>
module attributes {stable_mosaic.version = 11 : i64} {
  func.func @crisis_loss_kernel(%arg0: i32, %arg1: i32, %arg2: memref<1x1xf32, #tpu.memory_space<smem>>, %arg3: memref<1x1xf32, #tpu.memory_space<smem>>, %arg4: memref<6x8xf32, #tpu.memory_space<vmem>>, %arg5: memref<1x8xi32, #tpu.memory_space<vmem>>, %arg6: memref<6x1xf32, #tpu.memory_space<vmem>>, %arg7: memref<18x8xf32, #tpu.memory_space<vmem>>, %arg8: memref<1x1x1xf32, #tpu.memory_space<vmem>>) attributes {dimension_semantics = [#tpu.dimension_semantics<parallel>, #tpu.dimension_semantics<arbitrary>], iteration_bounds = array<i64: 2, 1>, scalar_prefetch = 0 : i64, scratch_operands = 0 : i64, tpu.core_type = #tpu.core_type<tc>, window_params = [{transform_indices = @transform_0, window_bounds = array<i64: 1, 1>}, {transform_indices = @transform_1, window_bounds = array<i64: 1, 1>}, {transform_indices = @transform_2, window_bounds = array<i64: 6, 8>}, {transform_indices = @transform_3, window_bounds = array<i64: 1, 8>}, {pipeline_mode = #tpu.pipeline_mode<synchronous>, transform_indices = @transform_4, window_bounds = array<i64: 6, 1>}, {transform_indices = @transform_5, window_bounds = array<i64: 18, 8>}, {transform_indices = @transform_6, window_bounds = array<i64: 1, 1, 1>}]} {
    %c1_i32 = arith.constant 1 : i32
    %0 = arith.muli %arg0, %c1_i32 : i32
    %1 = arith.addi %0, %arg1 : i32
    %c0_i32 = arith.constant 0 : i32
    %2 = arith.cmpi eq, %arg1, %c0_i32 : i32
    %3 = arith.extui %2 : i1 to i32
    %c0_i32_0 = arith.constant 0 : i32
    %4 = arith.cmpi ne, %3, %c0_i32_0 : i32
    scf.if %4 {
      %cst_56 = arith.constant 0.000000e+00 : f32
      %205 = vector.broadcast %cst_56 : f32 to vector<1x1x1xf32>
      %c0_57 = arith.constant 0 : index
      %c0_58 = arith.constant 0 : index
      %c0_59 = arith.constant 0 : index
      %206 = vector.load %arg8[%c0_57, %c0_58, %c0_59] : memref<1x1x1xf32, #tpu.memory_space<vmem>>, vector<1x1x1xf32>
      tpu.vector_store %arg8[%c0_57, %c0_58, %c0_59], %205 {strides = array<i32>} : memref<1x1x1xf32, #tpu.memory_space<vmem>>, vector<1x1x1xf32>,
    } else {
    }
    %c0 = arith.constant 0 : index
    %c0_1 = arith.constant 0 : index
    %5 = memref.load %arg2[%c0, %c0_1] : memref<1x1xf32, #tpu.memory_space<smem>>
    %c0_2 = arith.constant 0 : index
    %c0_3 = arith.constant 0 : index
    %6 = memref.load %arg3[%c0_2, %c0_3] : memref<1x1xf32, #tpu.memory_space<smem>>
    %cst = arith.constant 1.000000e+00 : f32
    %7 = arith.divf %cst, %5 : f32
    %c0_4 = arith.constant 0 : index
    %c0_5 = arith.constant 0 : index
    %8 = vector.load %arg4[%c0_4, %c0_5] : memref<6x8xf32, #tpu.memory_space<vmem>>, vector<6x8xf32>
    %c0_6 = arith.constant 0 : index
    %c0_7 = arith.constant 0 : index
    %9 = vector.load %arg5[%c0_6, %c0_7] : memref<1x8xi32, #tpu.memory_space<vmem>>, vector<1x8xi32>
    %c0_8 = arith.constant 0 : index
    %c0_9 = arith.constant 0 : index
    %10 = vector.load %arg6[%c0_8, %c0_9] : memref<6x1xf32, #tpu.memory_space<vmem>>, vector<6x1xf32>
    %11 = tpu.iota {dimensions = array<i32: 1>} : vector<1x8xi32>
    %c8_i32 = arith.constant 8 : i32
    %12 = arith.muli %1, %c8_i32 : i32
    %13 = vector.broadcast %12 : i32 to vector<1x8xi32>
    %14 = arith.addi %13, %11 : vector<1x8xi32>
    %c8_i32_10 = arith.constant 8 : i32
    %15 = vector.broadcast %c8_i32_10 : i32 to vector<1x8xi32>
    %16 = arith.cmpi slt, %14, %15 : vector<1x8xi32>
    %17 = arith.extui %16 : vector<1x8xi1> to vector<1x8xi32>
    %18 = arith.sitofp %17 : vector<1x8xi32> to vector<1x8xf32>
    %cst_11 = arith.constant 0.000000e+00 : f32
    %19 = vector.shape_cast %16 : vector<1x8xi1> to vector<1x8xi1>
    %20 = vector.broadcast %19 : vector<1x8xi1> to vector<6x8xi1>
    %21 = vector.broadcast %cst_11 : f32 to vector<6x8xf32>
    %22 = arith.select %20, %8, %21 : vector<6x8xi1>, vector<6x8xf32>
    %c0_i32_12 = arith.constant 0 : i32
    %23 = vector.broadcast %c0_i32_12 : i32 to vector<1x8xi32>
    %24 = arith.select %16, %9, %23 : vector<1x8xi1>, vector<1x8xi32>
    %25 = tpu.iota {dimensions = array<i32: 0>} : vector<6x8xi32>
    %26 = vector.broadcast %24 : vector<1x8xi32> to vector<6x8xi32>
    %27 = arith.cmpi eq, %25, %26 : vector<6x8xi32>
    %28 = arith.extui %27 : vector<6x8xi1> to vector<6x8xi32>
    %29 = arith.sitofp %28 : vector<6x8xi32> to vector<6x8xf32>
    %30 = vector.broadcast %7 : f32 to vector<6x8xf32>
    %31 = arith.mulf %22, %30 : vector<6x8xf32>
    %cst_13 = arith.constant dense<0xFF800000> : vector<8xf32>
    %32 = vector.multi_reduction <maximumf>, %31, %cst_13 [0] : vector<6x8xf32> to vector<8xf32>
    %33 = vector.shape_cast %32 : vector<8xf32> to vector<1x8xf32>
    %34 = vector.broadcast %33 : vector<1x8xf32> to vector<6x8xf32>
    %35 = arith.subf %31, %34 : vector<6x8xf32>
    %36 = math.exp %35 : vector<6x8xf32>
    %cst_14 = arith.constant dense<0.000000e+00> : vector<8xf32>
    %37 = vector.multi_reduction <add>, %36, %cst_14 [0] : vector<6x8xf32> to vector<8xf32>
    %38 = vector.shape_cast %37 : vector<8xf32> to vector<1x8xf32>
    %39 = math.log %38 : vector<1x8xf32>
    %40 = vector.broadcast %39 : vector<1x8xf32> to vector<6x8xf32>
    %41 = arith.subf %35, %40 : vector<6x8xf32>
    %42 = arith.mulf %29, %41 : vector<6x8xf32>
    %cst_15 = arith.constant dense<0.000000e+00> : vector<8xf32>
    %43 = vector.multi_reduction <add>, %42, %cst_15 [0] : vector<6x8xf32> to vector<8xf32>
    %44 = vector.shape_cast %43 : vector<8xf32> to vector<1x8xf32>
    %cst_16 = arith.constant 0.000000e+00 : f32
    %45 = vector.broadcast %cst_16 : f32 to vector<1x8xf32>
    %46 = arith.subf %45, %44 : vector<1x8xf32>
    %47 = vector.broadcast %10 : vector<6x1xf32> to vector<6x8xf32>
    %48 = arith.mulf %29, %47 : vector<6x8xf32>
    %cst_17 = arith.constant dense<0.000000e+00> : vector<8xf32>
    %49 = vector.multi_reduction <add>, %48, %cst_17 [0] : vector<6x8xf32> to vector<8xf32>
    %50 = vector.shape_cast %49 : vector<8xf32> to vector<1x8xf32>
    %51 = arith.mulf %46, %50 : vector<1x8xf32>
    %52 = arith.mulf %51, %18 : vector<1x8xf32>
    %53 = vector.shape_cast %52 : vector<1x8xf32> to vector<1x1x8xf32>
    %cst_18 = arith.constant dense<0.000000e+00> : vector<1xf32>
    %54 = vector.multi_reduction <add>, %53, %cst_18 [1, 2] : vector<1x1x8xf32> to vector<1xf32>
    %55 = vector.shape_cast %54 : vector<1xf32> to vector<1x1x1xf32>
    %56 = vector.extract %55[0, 0, 0] : f32 from vector<1x1x1xf32>
    %57 = vector.broadcast %56 : f32 to vector<1x1xf32>
    %58 = vector.extract_strided_slice %22 {offsets = [0, 0], sizes = [4, 8], strides = [1, 1]} : vector<6x8xf32> to vector<4x8xf32>
    %cst_19 = arith.constant dense<0.000000e+00> : vector<8xf32>
    %59 = vector.multi_reduction <add>, %58, %cst_19 [0] : vector<4x8xf32> to vector<8xf32>
    %60 = vector.shape_cast %59 : vector<8xf32> to vector<1x8xf32>
    %61 = vector.extract_strided_slice %22 {offsets = [4, 0], sizes = [2, 8], strides = [1, 1]} : vector<6x8xf32> to vector<2x8xf32>
    %cst_20 = arith.constant dense<0.000000e+00> : vector<8xf32>
    %62 = vector.multi_reduction <add>, %61, %cst_20 [0] : vector<2x8xf32> to vector<8xf32>
    %63 = vector.shape_cast %62 : vector<8xf32> to vector<1x8xf32>
    %64 = vector.extract_strided_slice %29 {offsets = [0, 0], sizes = [4, 8], strides = [1, 1]} : vector<6x8xf32> to vector<4x8xf32>
    %cst_21 = arith.constant dense<0.000000e+00> : vector<8xf32>
    %65 = vector.multi_reduction <add>, %64, %cst_21 [0] : vector<4x8xf32> to vector<8xf32>
    %66 = vector.shape_cast %65 : vector<8xf32> to vector<1x8xf32>
    %67 = arith.maximumf %63, %60 : vector<1x8xf32>
    %68 = arith.subf %63, %67 : vector<1x8xf32>
    %69 = math.exp %68 : vector<1x8xf32>
    %70 = arith.subf %60, %67 : vector<1x8xf32>
    %71 = math.exp %70 : vector<1x8xf32>
    %72 = arith.addf %69, %71 : vector<1x8xf32>
    %73 = math.log %72 : vector<1x8xf32>
    %74 = arith.addf %67, %73 : vector<1x8xf32>
    %75 = arith.subf %60, %74 : vector<1x8xf32>
    %76 = arith.mulf %66, %75 : vector<1x8xf32>
    %cst_22 = arith.constant 1.000000e+00 : f32
    %77 = vector.broadcast %cst_22 : f32 to vector<1x8xf32>
    %78 = arith.subf %77, %66 : vector<1x8xf32>
    %79 = arith.subf %63, %74 : vector<1x8xf32>
    %80 = arith.mulf %78, %79 : vector<1x8xf32>
    %81 = arith.addf %76, %80 : vector<1x8xf32>
    %cst_23 = arith.constant 0.000000e+00 : f32
    %82 = vector.broadcast %cst_23 : f32 to vector<1x8xf32>
    %83 = arith.subf %82, %81 : vector<1x8xf32>
    %84 = arith.mulf %83, %18 : vector<1x8xf32>
    %85 = vector.shape_cast %84 : vector<1x8xf32> to vector<1x1x8xf32>
    %cst_24 = arith.constant dense<0.000000e+00> : vector<1xf32>
    %86 = vector.multi_reduction <add>, %85, %cst_24 [1, 2] : vector<1x1x8xf32> to vector<1xf32>
    %87 = vector.shape_cast %86 : vector<1xf32> to vector<1x1x1xf32>
    %88 = vector.extract %87[0, 0, 0] : f32 from vector<1x1x1xf32>
    %89 = vector.broadcast %88 : f32 to vector<1x1xf32>
    %90 = vector.extract_strided_slice %22 {offsets = [0, 0], sizes = [1, 8], strides = [1, 1]} : vector<6x8xf32> to vector<1x8xf32>
    %91 = vector.extract_strided_slice %22 {offsets = [2, 0], sizes = [1, 8], strides = [1, 1]} : vector<6x8xf32> to vector<1x8xf32>
    %92 = arith.addf %90, %91 : vector<1x8xf32>
    %cst_25 = arith.constant 1.000000e+00 : f32
    %93 = vector.broadcast %cst_25 : f32 to vector<1x8xf32>
    %94 = arith.subf %93, %92 : vector<1x8xf32>
    %95 = vector.extract_strided_slice %29 {offsets = [0, 0], sizes = [1, 8], strides = [1, 1]} : vector<6x8xf32> to vector<1x8xf32>
    %96 = vector.extract_strided_slice %29 {offsets = [2, 0], sizes = [1, 8], strides = [1, 1]} : vector<6x8xf32> to vector<1x8xf32>
    %97 = arith.addf %95, %96 : vector<1x8xf32>
    %98 = arith.maximumf %94, %92 : vector<1x8xf32>
    %99 = arith.subf %94, %98 : vector<1x8xf32>
    %100 = math.exp %99 : vector<1x8xf32>
    %101 = arith.subf %92, %98 : vector<1x8xf32>
    %102 = math.exp %101 : vector<1x8xf32>
    %103 = arith.addf %100, %102 : vector<1x8xf32>
    %104 = math.log %103 : vector<1x8xf32>
    %105 = arith.addf %98, %104 : vector<1x8xf32>
    %106 = arith.subf %92, %105 : vector<1x8xf32>
    %107 = arith.mulf %97, %106 : vector<1x8xf32>
    %cst_26 = arith.constant 1.000000e+00 : f32
    %108 = vector.broadcast %cst_26 : f32 to vector<1x8xf32>
    %109 = arith.subf %108, %97 : vector<1x8xf32>
    %110 = arith.subf %94, %105 : vector<1x8xf32>
    %111 = arith.mulf %109, %110 : vector<1x8xf32>
    %112 = arith.addf %107, %111 : vector<1x8xf32>
    %cst_27 = arith.constant 0.000000e+00 : f32
    %113 = vector.broadcast %cst_27 : f32 to vector<1x8xf32>
    %114 = arith.subf %113, %112 : vector<1x8xf32>
    %115 = arith.mulf %114, %18 : vector<1x8xf32>
    %116 = vector.shape_cast %115 : vector<1x8xf32> to vector<1x1x8xf32>
    %cst_28 = arith.constant dense<0.000000e+00> : vector<1xf32>
    %117 = vector.multi_reduction <add>, %116, %cst_28 [1, 2] : vector<1x1x8xf32> to vector<1xf32>
    %118 = vector.shape_cast %117 : vector<1xf32> to vector<1x1x1xf32>
    %119 = vector.extract %118[0, 0, 0] : f32 from vector<1x1x1xf32>
    %120 = vector.broadcast %119 : f32 to vector<1x1xf32>
    %cst_29 = arith.constant 1.200000e+00 : f32
    %121 = vector.broadcast %cst_29 : f32 to vector<1x1xf32>
    %122 = arith.mulf %121, %89 : vector<1x1xf32>
    %123 = arith.addf %57, %122 : vector<1x1xf32>
    %cst_30 = arith.constant 2.000000e+00 : f32
    %124 = vector.broadcast %cst_30 : f32 to vector<1x1xf32>
    %125 = arith.mulf %124, %120 : vector<1x1xf32>
    %126 = arith.addf %123, %125 : vector<1x1xf32>
    %c0_31 = arith.constant 0 : index
    %c0_32 = arith.constant 0 : index
    %127 = vector.load %arg7[%c0_31, %c0_32] : memref<18x8xf32, #tpu.memory_space<vmem>>, vector<18x8xf32>
    %cst_33 = arith.constant 0.000000e+00 : f32
    %128 = vector.shape_cast %16 : vector<1x8xi1> to vector<1x8xi1>
    %129 = vector.broadcast %128 : vector<1x8xi1> to vector<18x8xi1>
    %130 = vector.broadcast %cst_33 : f32 to vector<18x8xf32>
    %131 = arith.select %129, %127, %130 : vector<18x8xi1>, vector<18x8xf32>
    %cst_34 = arith.constant 0.000000e+00 : f32
    %132 = vector.broadcast %cst_34 : f32 to vector<1x8xf32>
    %cst_35 = arith.constant 0.000000e+00 : f32
    %133 = vector.broadcast %cst_35 : f32 to vector<6x8xf32>
    %134 = vector.extract_strided_slice %131 {offsets = [12, 0], sizes = [6, 8], strides = [1, 1]} : vector<18x8xf32> to vector<6x8xf32>
    %cst_36 = arith.constant dense<0xFF800000> : vector<8xf32>
    %135 = vector.multi_reduction <maximumf>, %134, %cst_36 [0] : vector<6x8xf32> to vector<8xf32>
    %136 = vector.shape_cast %135 : vector<8xf32> to vector<1x8xf32>
    %137 = vector.broadcast %136 : vector<1x8xf32> to vector<6x8xf32>
    %138 = arith.subf %134, %137 : vector<6x8xf32>
    %139 = math.exp %138 : vector<6x8xf32>
    %cst_37 = arith.constant dense<0.000000e+00> : vector<8xf32>
    %140 = vector.multi_reduction <add>, %139, %cst_37 [0] : vector<6x8xf32> to vector<8xf32>
    %141 = vector.shape_cast %140 : vector<8xf32> to vector<1x8xf32>
    %142 = math.log %141 : vector<1x8xf32>
    %143 = vector.broadcast %142 : vector<1x8xf32> to vector<6x8xf32>
    %144 = arith.subf %138, %143 : vector<6x8xf32>
    %145 = math.exp %144 : vector<6x8xf32>
    %146 = arith.mulf %145, %144 : vector<6x8xf32>
    %cst_38 = arith.constant dense<0.000000e+00> : vector<8xf32>
    %147 = vector.multi_reduction <add>, %146, %cst_38 [0] : vector<6x8xf32> to vector<8xf32>
    %148 = vector.shape_cast %147 : vector<8xf32> to vector<1x8xf32>
    %cst_39 = arith.constant 2.000000e+00 : f32
    %149 = vector.broadcast %cst_39 : f32 to vector<1x8xf32>
    %150 = arith.mulf %149, %148 : vector<1x8xf32>
    %151 = arith.addf %132, %150 : vector<1x8xf32>
    %152 = arith.addf %133, %145 : vector<6x8xf32>
    %153 = vector.extract_strided_slice %131 {offsets = [6, 0], sizes = [6, 8], strides = [1, 1]} : vector<18x8xf32> to vector<6x8xf32>
    %cst_40 = arith.constant dense<0xFF800000> : vector<8xf32>
    %154 = vector.multi_reduction <maximumf>, %153, %cst_40 [0] : vector<6x8xf32> to vector<8xf32>
    %155 = vector.shape_cast %154 : vector<8xf32> to vector<1x8xf32>
    %156 = vector.broadcast %155 : vector<1x8xf32> to vector<6x8xf32>
    %157 = arith.subf %153, %156 : vector<6x8xf32>
    %158 = math.exp %157 : vector<6x8xf32>
    %cst_41 = arith.constant dense<0.000000e+00> : vector<8xf32>
    %159 = vector.multi_reduction <add>, %158, %cst_41 [0] : vector<6x8xf32> to vector<8xf32>
    %160 = vector.shape_cast %159 : vector<8xf32> to vector<1x8xf32>
    %161 = math.log %160 : vector<1x8xf32>
    %162 = vector.broadcast %161 : vector<1x8xf32> to vector<6x8xf32>
    %163 = arith.subf %157, %162 : vector<6x8xf32>
    %164 = math.exp %163 : vector<6x8xf32>
    %165 = arith.mulf %164, %163 : vector<6x8xf32>
    %cst_42 = arith.constant dense<0.000000e+00> : vector<8xf32>
    %166 = vector.multi_reduction <add>, %165, %cst_42 [0] : vector<6x8xf32> to vector<8xf32>
    %167 = vector.shape_cast %166 : vector<8xf32> to vector<1x8xf32>
    %cst_43 = arith.constant 1.000000e+00 : f32
    %168 = vector.broadcast %cst_43 : f32 to vector<1x8xf32>
    %169 = arith.mulf %168, %167 : vector<1x8xf32>
    %170 = arith.addf %151, %169 : vector<1x8xf32>
    %171 = arith.mulf %163, %152 : vector<6x8xf32>
    %cst_44 = arith.constant dense<0.000000e+00> : vector<8xf32>
    %172 = vector.multi_reduction <add>, %171, %cst_44 [0] : vector<6x8xf32> to vector<8xf32>
    %173 = vector.shape_cast %172 : vector<8xf32> to vector<1x8xf32>
    %174 = arith.subf %170, %173 : vector<1x8xf32>
    %175 = arith.addf %152, %164 : vector<6x8xf32>
    %176 = vector.extract_strided_slice %131 {offsets = [0, 0], sizes = [6, 8], strides = [1, 1]} : vector<18x8xf32> to vector<6x8xf32>
    %cst_45 = arith.constant dense<0xFF800000> : vector<8xf32>
    %177 = vector.multi_reduction <maximumf>, %176, %cst_45 [0] : vector<6x8xf32> to vector<8xf32>
    %178 = vector.shape_cast %177 : vector<8xf32> to vector<1x8xf32>
    %179 = vector.broadcast %178 : vector<1x8xf32> to vector<6x8xf32>
    %180 = arith.subf %176, %179 : vector<6x8xf32>
    %181 = math.exp %180 : vector<6x8xf32>
    %cst_46 = arith.constant dense<0.000000e+00> : vector<8xf32>
    %182 = vector.multi_reduction <add>, %181, %cst_46 [0] : vector<6x8xf32> to vector<8xf32>
    %183 = vector.shape_cast %182 : vector<8xf32> to vector<1x8xf32>
    %184 = math.log %183 : vector<1x8xf32>
    %185 = vector.broadcast %184 : vector<1x8xf32> to vector<6x8xf32>
    %186 = arith.subf %180, %185 : vector<6x8xf32>
    %187 = arith.mulf %186, %175 : vector<6x8xf32>
    %cst_47 = arith.constant dense<0.000000e+00> : vector<8xf32>
    %188 = vector.multi_reduction <add>, %187, %cst_47 [0] : vector<6x8xf32> to vector<8xf32>
    %189 = vector.shape_cast %188 : vector<8xf32> to vector<1x8xf32>
    %190 = arith.subf %174, %189 : vector<1x8xf32>
    %191 = arith.mulf %190, %18 : vector<1x8xf32>
    %192 = vector.shape_cast %191 : vector<1x8xf32> to vector<1x1x8xf32>
    %cst_48 = arith.constant dense<0.000000e+00> : vector<1xf32>
    %193 = vector.multi_reduction <add>, %192, %cst_48 [1, 2] : vector<1x1x8xf32> to vector<1xf32>
    %194 = vector.shape_cast %193 : vector<1xf32> to vector<1x1x1xf32>
    %195 = vector.extract %194[0, 0, 0] : f32 from vector<1x1x1xf32>
    %196 = vector.broadcast %195 : f32 to vector<1x1xf32>
    %cst_49 = arith.constant 0.0333333351 : f32
    %197 = arith.mulf %cst_49, %6 : f32
    %198 = vector.broadcast %197 : f32 to vector<1x1xf32>
    %199 = arith.mulf %198, %196 : vector<1x1xf32>
    %200 = arith.subf %126, %199 : vector<1x1xf32>
    %c0_50 = arith.constant 0 : index
    %c0_51 = arith.constant 0 : index
    %c0_52 = arith.constant 0 : index
    %201 = vector.load %arg8[%c0_50, %c0_51, %c0_52] : memref<1x1x1xf32, #tpu.memory_space<vmem>>, vector<1x1x1xf32>
    %202 = vector.shape_cast %200 : vector<1x1xf32> to vector<1x1x1xf32>
    %203 = arith.addf %201, %202 : vector<1x1x1xf32>
    %c0_53 = arith.constant 0 : index
    %c0_54 = arith.constant 0 : index
    %c0_55 = arith.constant 0 : index
    %204 = vector.load %arg8[%c0_53, %c0_54, %c0_55] : memref<1x1x1xf32, #tpu.memory_space<vmem>>, vector<1x1x1xf32>
    tpu.vector_store %arg8[%c0_53, %c0_54, %c0_55], %203 {strides = array<i32>} : memref<1x1x1xf32, #tpu.memory_space<vmem>>, vector<1x1x1xf32>,
    return
  }
  func.func @transform_0(%arg0: i32, %arg1: i32) -> (i32, i32) {
    %c0_i32 = arith.constant 0 : i32
    %c0_i32_0 = arith.constant 0 : i32
    %c0_i32_1 = arith.constant 0 : i32
    return %c0_i32, %c0_i32_0 : i32, i32
  }
  func.func @transform_1(%arg0: i32, %arg1: i32) -> (i32, i32) {
    %c0_i32 = arith.constant 0 : i32
    %c0_i32_0 = arith.constant 0 : i32
    %c0_i32_1 = arith.constant 0 : i32
    return %c0_i32, %c0_i32_0 : i32, i32
  }
  func.func @transform_2(%arg0: i32, %arg1: i32) -> (i32, i32) {
    %c1_i32 = arith.constant 1 : i32
    %0 = arith.muli %arg0, %c1_i32 : i32
    %1 = arith.addi %0, %arg1 : i32
    %c0_i32 = arith.constant 0 : i32
    %2 = arith.minsi %1, %c0_i32 : i32
    %c0_i32_0 = arith.constant 0 : i32
    %c0_i32_1 = arith.constant 0 : i32
    return %c0_i32_0, %2 : i32, i32
  }
  func.func @transform_3(%arg0: i32, %arg1: i32) -> (i32, i32) {
    %c1_i32 = arith.constant 1 : i32
    %0 = arith.muli %arg0, %c1_i32 : i32
    %1 = arith.addi %0, %arg1 : i32
    %c0_i32 = arith.constant 0 : i32
    %2 = arith.minsi %1, %c0_i32 : i32
    %c0_i32_0 = arith.constant 0 : i32
    %c0_i32_1 = arith.constant 0 : i32
    return %c0_i32_0, %2 : i32, i32
  }
  func.func @transform_4(%arg0: i32, %arg1: i32) -> (i32, i32) {
    %c0_i32 = arith.constant 0 : i32
    %c0_i32_0 = arith.constant 0 : i32
    %c0_i32_1 = arith.constant 0 : i32
    return %c0_i32, %c0_i32_0 : i32, i32
  }
  func.func @transform_5(%arg0: i32, %arg1: i32) -> (i32, i32) {
    %c1_i32 = arith.constant 1 : i32
    %0 = arith.muli %arg0, %c1_i32 : i32
    %1 = arith.addi %0, %arg1 : i32
    %c0_i32 = arith.constant 0 : i32
    %2 = arith.minsi %1, %c0_i32 : i32
    %c0_i32_0 = arith.constant 0 : i32
    %c0_i32_1 = arith.constant 0 : i32
    return %c0_i32_0, %2 : i32, i32
  }
  func.func @transform_6(%arg0: i32, %arg1: i32) -> (i32, i32, i32) {
    %c0_i32 = arith.constant 0 : i32
    %c0_i32_0 = arith.constant 0 : i32
    %c0_i32_1 = arith.constant 0 : i32
    return %arg0, %c0_i32, %c0_i32_0 : i32, i32, i32
  }
}

</mosaic_0001>

<llo_original>
// kernel: crisis_adaptive_loss.1
$region0: #{crisis_adaptive_loss.1}
  #allocation0 [shape = 'u32[]', space=smem, size = 0x4, offset = 0x4, fixed_abs, tag = 'smem constant byte address 0x4 - core index']
  #allocation1 [shape = 'u32[144,128]{1,0:T(1,128)}', space=vmem, size = 0x12000, scoped, tag = 'internal scratch']
  #allocation2 [shape = 'f32[1,1]{1,0:T(1,128)S(6)}', space=smem, size = 0x200, scoped, tag = 'scoped memory for crisis_adaptive_loss.1']
  #allocation3 [shape = 'f32[1,1]{1,0:T(1,128)S(6)}', space=smem, size = 0x200, scoped, tag = 'scoped memory for crisis_adaptive_loss.1']
  %s0 = inlined_call_operand.<no memory space> [shape: f32[1,1], index: 0, kind: input, shape index: {}]
  %s1 = inlined_call_operand.<no memory space> [shape: f32[1,1], index: 1, kind: input, shape index: {}]
  %s2 = inlined_call_operand.vmem [shape: f32[6,8], index: 2, kind: input, shape index: {}]
  %s3 = inlined_call_operand.vmem [shape: s32[1,8], index: 3, kind: input, shape index: {}]
  %s4 = inlined_call_operand.vmem [shape: f32[6,1], index: 4, kind: input, shape index: {}]
  %s5 = inlined_call_operand.vmem [shape: f32[18,8], index: 5, kind: input, shape index: {}]
  %s6 = inlined_call_operand.vmem [shape: f32[2,1,1], index: 6, kind: output, shape index: {}]
  %s7 = sld [smem:[#allocation0]]
  $region61: #{crisis_adaptive_loss.1} parent=0
    _
  %s9 = ssub.s32 1, %s7
  %s10 = scalar_select 0, %s9, %s7
  %11 = sst [smem:[#allocation2]] %s0
  %12 = sst [smem:[#allocation3]] %s1
  loop: start=0, step=1, limit=4
  $region2: #{crisis_adaptive_loss.1} parent=0 // loop_pre_header
    _
  $region3: #{crisis_adaptive_loss.1} parent=0 // loop_header
    %s14 = sphi 0, %s18
    %p15 = scmp.ge.s32.totalorder %s14, 4
    %s21 = sphi 0, %s33
    %s22 = sphi 0, %s29
    %s23 = sphi 0, %s21
    %s24 = sphi 0, %s22
    %s25 = sphi 0, %s23
    %s26 = sphi 0, %s24
    %s34 = sphi 0, %s34
    %s36 = sphi 0, %s34
    %s37 = sphi 0, %s36
    %s51 = sphi 0, %s37
    %s55 = sphi 0, %s55
    %s57 = sphi 0, %s55
    %s58 = sphi 0, %s57
    %s72 = sphi 0, %s58
    %s84 = sphi 0, %s86
    %s87 = sphi 0, %s84
    %s88 = sphi 0, %s87
    %s104 = sphi 0, %s88
    %s116 = sphi 0, %s118
    %s119 = sphi 0, %s116
    %s120 = sphi 0, %s119
    %s136 = sphi 0, %s120
    %s140 = sphi 0, %s140
    %s142 = sphi 0, %s140
    %s143 = sphi 0, %s142
    %s157 = sphi 0, %s143
    %s169 = sphi 0, %s171
    %s172 = sphi 0, %s169
    %s173 = sphi 0, %s172
    %s189 = sphi 0, %s173
    %s195 = sphi 0, %s197
    %s198 = sphi 0, %s195
    %s199 = sphi 0, %s198
    %s215 = sphi 0, %s199
  $region4: #{crisis_adaptive_loss.1} parent=0 // loop_header_branch
    %17 = sbr.rel (%p15) target = $region8
  $region5: #{crisis_adaptive_loss.1} parent=0 // loop_body
    %s19 = ssub.s32 %s14, 1
    %s20 = ssub.s32 %s14, 2
    %s27 = sadd.s32 1, %s22
    %p28 = scmp.ge.s32.totalorder %s27, 1
    %s29 = scalar_select %p28, 0, %s27
    %s30 = sadd.s32 1, %s21
    %s31 = scalar_select %p28, %s30, %s21
    %p32 = scmp.ge.s32.totalorder %s31, 2
    %s33 = scalar_select %p32, 0, %s31
    %s35 = sadd.s32 %s34, 1
    %p38 = scmp.eq.s32.totalorder %s14, 1
    %p39 = scmp.ne.s32.totalorder %s34, %s36
    %p40 = scmp.eq.s32.totalorder %s14, 0
    %p41 = por %p39, %p40
    %p42 = scmp.ne.s32.totalorder %s34, %s36
    %p43 = scmp.eq.s32.totalorder %s19, 1
    %p44 = por %p42, %p43
    %p45 = scmp.ne.s32.totalorder %s36, %s37
    %p46 = scmp.eq.s32.totalorder %s19, 0
    %p47 = por %p45, %p46
    %p48 = scmp.ne.s32.totalorder %s36, %s37
    %p49 = scmp.eq.s32.totalorder %s20, 1
    %p50 = por %p48, %p49
    %p52 = scmp.ne.s32.totalorder %s37, %s51
    %p53 = scmp.eq.s32.totalorder %s20, 0
    %p54 = por %p52, %p53
    %s56 = sadd.s32 %s55, 1
    %p59 = scmp.eq.s32.totalorder %s14, 1
    %p60 = scmp.ne.s32.totalorder %s55, %s57
    %p61 = scmp.eq.s32.totalorder %s14, 0
    %p62 = por %p60, %p61
    %p63 = scmp.ne.s32.totalorder %s55, %s57
    %p64 = scmp.eq.s32.totalorder %s19, 1
    %p65 = por %p63, %p64
    %p66 = scmp.ne.s32.totalorder %s57, %s58
    %p67 = scmp.eq.s32.totalorder %s19, 0
    %p68 = por %p66, %p67
    %p69 = scmp.ne.s32.totalorder %s57, %s58
    %p70 = scmp.eq.s32.totalorder %s20, 1
    %p71 = por %p69, %p70
    %p73 = scmp.ne.s32.totalorder %s58, %s72
    %p74 = scmp.eq.s32.totalorder %s20, 0
    %p75 = por %p73, %p74
    %s76 = sadd.s32 %s21, %s22
    %p77 = scmp.lt.s32.totalorder %s76, 0
    %s78 = scalar_select %p77, %s76, 0
    %s79 = sadd.s32 %s33, %s29
    %p80 = scmp.lt.s32.totalorder %s79, 0
    %s81 = scalar_select %p80, %s79, 0
    %s82 = ssub.s32 %s78, %s81
    %p83 = scmp.eq.s32.totalorder %s82, 0
    %s85 = sadd.s32 %s84, 1
    %s86 = scalar_select %p83, %s84, %s85
    %p89 = pneg %p83
    %p90 = scmp.eq.s32.totalorder %s14, 1
    %p91 = por %p89, %p90
    %p92 = scmp.ne.s32.totalorder %s84, %s87
    %p93 = scmp.eq.s32.totalorder %s14, 0
    %p94 = por %p92, %p93
    %p95 = scmp.ne.s32.totalorder %s84, %s87
    %p96 = scmp.eq.s32.totalorder %s19, 1
    %p97 = por %p95, %p96
    %p98 = scmp.ne.s32.totalorder %s87, %s88
    %p99 = scmp.eq.s32.totalorder %s19, 0
    %p100 = por %p98, %p99
    %p101 = scmp.ne.s32.totalorder %s87, %s88
    %p102 = scmp.eq.s32.totalorder %s20, 1
    %p103 = por %p101, %p102
    %p105 = scmp.ne.s32.totalorder %s88, %s104
    %p106 = scmp.eq.s32.totalorder %s20, 0
    %p107 = por %p105, %p106
    %s108 = sadd.s32 %s21, %s22
    %p109 = scmp.lt.s32.totalorder %s108, 0
    %s110 = scalar_select %p109, %s108, 0
    %s111 = sadd.s32 %s33, %s29
    %p112 = scmp.lt.s32.totalorder %s111, 0
    %s113 = scalar_select %p112, %s111, 0
    %s114 = ssub.s32 %s110, %s113
    %p115 = scmp.eq.s32.totalorder %s114, 0
    %s117 = sadd.s32 %s116, 1
    %s118 = scalar_select %p115, %s116, %s117
    %p121 = pneg %p115
    %p122 = scmp.eq.s32.totalorder %s14, 1
    %p123 = por %p121, %p122
    %p124 = scmp.ne.s32.totalorder %s116, %s119
    %p125 = scmp.eq.s32.totalorder %s14, 0
    %p126 = por %p124, %p125
    %p127 = scmp.ne.s32.totalorder %s116, %s119
    %p128 = scmp.eq.s32.totalorder %s19, 1
    %p129 = por %p127, %p128
    %p130 = scmp.ne.s32.totalorder %s119, %s120
    %p131 = scmp.eq.s32.totalorder %s19, 0
    %p132 = por %p130, %p131
    %p133 = scmp.ne.s32.totalorder %s119, %s120
    %p134 = scmp.eq.s32.totalorder %s20, 1
    %p135 = por %p133, %p134
    %p137 = scmp.ne.s32.totalorder %s120, %s136
    %p138 = scmp.eq.s32.totalorder %s20, 0
    %p139 = por %p137, %p138
    %s141 = sadd.s32 %s140, 1
    %p144 = scmp.eq.s32.totalorder %s14, 1
    %p145 = scmp.ne.s32.totalorder %s140, %s142
    %p146 = scmp.eq.s32.totalorder %s14, 0
    %p147 = por %p145, %p146
    %p148 = scmp.ne.s32.totalorder %s140, %s142
    %p149 = scmp.eq.s32.totalorder %s19, 1
    %p150 = por %p148, %p149
    %p151 = scmp.ne.s32.totalorder %s142, %s143
    %p152 = scmp.eq.s32.totalorder %s19, 0
    %p153 = por %p151, %p152
    %p154 = scmp.ne.s32.totalorder %s142, %s143
    %p155 = scmp.eq.s32.totalorder %s20, 1
    %p156 = por %p154, %p155
    %p158 = scmp.ne.s32.totalorder %s143, %s157
    %p159 = scmp.eq.s32.totalorder %s20, 0
    %p160 = por %p158, %p159
    %s161 = sadd.s32 %s21, %s22
    %p162 = scmp.lt.s32.totalorder %s161, 0
    %s163 = scalar_select %p162, %s161, 0
    %s164 = sadd.s32 %s33, %s29
    %p165 = scmp.lt.s32.totalorder %s164, 0
    %s166 = scalar_select %p165, %s164, 0
    %s167 = ssub.s32 %s163, %s166
    %p168 = scmp.eq.s32.totalorder %s167, 0
    %s170 = sadd.s32 %s169, 1
    %s171 = scalar_select %p168, %s169, %s170
    %p174 = pneg %p168
    %p175 = scmp.eq.s32.totalorder %s14, 1
    %p176 = por %p174, %p175
    %p177 = scmp.ne.s32.totalorder %s169, %s172
    %p178 = scmp.eq.s32.totalorder %s14, 0
    %p179 = por %p177, %p178
    %p180 = scmp.ne.s32.totalorder %s169, %s172
    %p181 = scmp.eq.s32.totalorder %s19, 1
    %p182 = por %p180, %p181
    %p183 = scmp.ne.s32.totalorder %s172, %s173
    %p184 = scmp.eq.s32.totalorder %s19, 0
    %p185 = por %p183, %p184
    %p186 = scmp.ne.s32.totalorder %s172, %s173
    %p187 = scmp.eq.s32.totalorder %s20, 1
    %p188 = por %p186, %p187
    %p190 = scmp.ne.s32.totalorder %s173, %s189
    %p191 = scmp.eq.s32.totalorder %s20, 0
    %p192 = por %p190, %p191
    %s193 = ssub.s32 %s21, %s33
    %p194 = scmp.eq.s32.totalorder %s193, 0
    %s196 = sadd.s32 %s195, 1
    %s197 = scalar_select %p194, %s195, %s196
    %p200 = pneg %p194
    %p201 = scmp.eq.s32.totalorder %s14, 1
    %p202 = por %p200, %p201
    %p203 = scmp.ne.s32.totalorder %s195, %s198
    %p204 = scmp.eq.s32.totalorder %s14, 0
    %p205 = por %p203, %p204
    %p206 = scmp.ne.s32.totalorder %s195, %s198
    %p207 = scmp.eq.s32.totalorder %s19, 1
    %p208 = por %p206, %p207
    %p209 = scmp.ne.s32.totalorder %s198, %s199
    %p210 = scmp.eq.s32.totalorder %s19, 0
    %p211 = por %p209, %p210
    %p212 = scmp.ne.s32.totalorder %s198, %s199
    %p213 = scmp.eq.s32.totalorder %s20, 1
    %p214 = por %p212, %p213
    %p216 = scmp.ne.s32.totalorder %s199, %s215
    %p217 = scmp.eq.s32.totalorder %s20, 0
    %p218 = por %p216, %p217
    %p219 = scmp.le.s32.totalorder 1, %s14
    %p220 = scmp.lt.s32.totalorder %s14, 3
    %p221 = pnand %p219, %p220
    %p222 = pneg %p221
    // Predicated region
    $region9: #{crisis_adaptive_loss.1} parent=5 // pred_check
      _
    $region10: #{crisis_adaptive_loss.1} parent=5 // pred_check_branch
      %224 = sbr.rel (%p221) target = $region12
    $region11: #{crisis_adaptive_loss.1} parent=5 // pred_region
      %s225 = ssub.s32 %s14, 1
      // Predicated region
      $region13: #{crisis_adaptive_loss.1} parent=11 // pred_check
        %p226 = pneg %p47
      $region14: #{crisis_adaptive_loss.1} parent=11 // pred_check_branch
        %228 = sbr.rel (%p226) target = $region16
      $region15: #{crisis_adaptive_loss.1} parent=11 // pred_region
        _
      $region16: #{crisis_adaptive_loss.1} parent=11 // pred_fallthru
        _
      // Predicated region
      $region17: #{crisis_adaptive_loss.1} parent=11 // pred_check
        %p229 = pneg %p68
      $region18: #{crisis_adaptive_loss.1} parent=11 // pred_check_branch
        %231 = sbr.rel (%p229) target = $region20
      $region19: #{crisis_adaptive_loss.1} parent=11 // pred_region
        _
      $region20: #{crisis_adaptive_loss.1} parent=11 // pred_fallthru
        _
      // Predicated region
      $region21: #{crisis_adaptive_loss.1} parent=11 // pred_check
        %p232 = pneg %p153
      $region22: #{crisis_adaptive_loss.1} parent=11 // pred_check_branch
        %234 = sbr.rel (%p232) target = $region24
      $region23: #{crisis_adaptive_loss.1} parent=11 // pred_region
        _
      $region24: #{crisis_adaptive_loss.1} parent=11 // pred_fallthru
        _
    $region12: #{crisis_adaptive_loss.1} parent=5 // pred_fallthru
      _
    %p235 = scmp.lt.s32.totalorder %s14, 2
    // Predicated region
    $region25: #{crisis_adaptive_loss.1} parent=5 // pred_check
      %p236 = pneg %p235
    $region26: #{crisis_adaptive_loss.1} parent=5 // pred_check_branch
      %238 = sbr.rel (%p236) target = $region28
    $region27: #{crisis_adaptive_loss.1} parent=5 // pred_region
      // Predicated region
      $region29: #{crisis_adaptive_loss.1} parent=27 // pred_check
        %p239 = pneg %p94
      $region30: #{crisis_adaptive_loss.1} parent=27 // pred_check_branch
        %241 = sbr.rel (%p239) target = $region32
      $region31: #{crisis_adaptive_loss.1} parent=27 // pred_region
        %s242 = sadd.s32 %s21, %s22
        %p243 = scmp.lt.s32.totalorder %s242, 0
        %s244 = scalar_select %p243, %s242, 0
        %p245 = scmp.lt.s32.totalorder %s244, 0
        %s246 = scalar_select %p245, %s244, 0
        %s247 = smul.addr %s246, 8
        %s248 = scalar_lea.vmem %s2, %s247
        %s249 = sadd.s32 %s21, %s22
        %p250 = scmp.lt.s32.totalorder %s249, 0
        %s251 = scalar_select %p250, %s249, 0
      $region32: #{crisis_adaptive_loss.1} parent=27 // pred_fallthru
        _
      // Predicated region
      $region33: #{crisis_adaptive_loss.1} parent=27 // pred_check
        %p252 = pneg %p126
      $region34: #{crisis_adaptive_loss.1} parent=27 // pred_check_branch
        %254 = sbr.rel (%p252) target = $region36
      $region35: #{crisis_adaptive_loss.1} parent=27 // pred_region
        %s255 = sadd.s32 %s21, %s22
        %p256 = scmp.lt.s32.totalorder %s255, 0
        %s257 = scalar_select %p256, %s255, 0
        %p258 = scmp.lt.s32.totalorder %s257, 0
        %s259 = scalar_select %p258, %s257, 0
        %s260 = scalar_lea.vmem %s3, %s259
        %s261 = sadd.s32 %s21, %s22
        %p262 = scmp.lt.s32.totalorder %s261, 0
        %s263 = scalar_select %p262, %s261, 0
      $region36: #{crisis_adaptive_loss.1} parent=27 // pred_fallthru
        _
      // Predicated region
      $region37: #{crisis_adaptive_loss.1} parent=27 // pred_check
        %p264 = pneg %p179
      $region38: #{crisis_adaptive_loss.1} parent=27 // pred_check_branch
        %266 = sbr.rel (%p264) target = $region40
      $region39: #{crisis_adaptive_loss.1} parent=27 // pred_region
        %s267 = sadd.s32 %s21, %s22
        %p268 = scmp.lt.s32.totalorder %s267, 0
        %s269 = scalar_select %p268, %s267, 0
        %p270 = scmp.lt.s32.totalorder %s269, 0
        %s271 = scalar_select %p270, %s269, 0
        %s272 = smul.addr %s271, 8
        %s273 = scalar_lea.vmem %s5, %s272
        %s274 = sadd.s32 %s21, %s22
        %p275 = scmp.lt.s32.totalorder %s274, 0
        %s276 = scalar_select %p275, %s274, 0
      $region40: #{crisis_adaptive_loss.1} parent=27 // pred_fallthru
        _
    $region28: #{crisis_adaptive_loss.1} parent=5 // pred_fallthru
      _
    %p277 = scmp.le.s32.totalorder 1, %s14
    %p278 = scmp.lt.s32.totalorder %s14, 3
    %p279 = pnand %p277, %p278
    %p280 = pneg %p279
    // Predicated region
    $region41: #{crisis_adaptive_loss.1} parent=5 // pred_check
      _
    $region42: #{crisis_adaptive_loss.1} parent=5 // pred_check_branch
      %282 = sbr.rel (%p279) target = $region44
    $region43: #{crisis_adaptive_loss.1} parent=5 // pred_region
      %s283 = ssub.s32 %s14, 1
      %p284 = pneg %p47
      %p285 = pneg %p44
      %p286 = pneg %p68
      %p287 = pneg %p65
      %s288 = sadd.s32 %s23, %s24
      %p289 = scmp.lt.s32.totalorder %s288, 0
      %s290 = scalar_select %p289, %s288, 0
      %p291 = scmp.lt.s32.totalorder %s290, 0
      %s292 = scalar_select %p291, %s290, 0
      %s293 = smul.addr %s292, 8
      %s294 = scalar_lea.vmem %s2, %s293
      %p295 = pneg %p100
      %p296 = pneg %p97
      %s297 = sadd.s32 %s23, %s24
      %p298 = scmp.lt.s32.totalorder %s297, 0
      %s299 = scalar_select %p298, %s297, 0
      %p300 = scmp.lt.s32.totalorder %s299, 0
      %s301 = scalar_select %p300, %s299, 0
      %s302 = scalar_lea.vmem %s3, %s301
      %p303 = pneg %p132
      %p304 = pneg %p129
      %p305 = pneg %p153
      %p306 = pneg %p150
      %s307 = sadd.s32 %s23, %s24
      %p308 = scmp.lt.s32.totalorder %s307, 0
      %s309 = scalar_select %p308, %s307, 0
      %p310 = scmp.lt.s32.totalorder %s309, 0
      %s311 = scalar_select %p310, %s309, 0
      %s312 = smul.addr %s311, 8
      %s313 = scalar_lea.vmem %s5, %s312
      %p314 = pneg %p185
      %p315 = pneg %p182
      %p316 = pneg %p211
      %p317 = pneg %p208
      %p318 = scmp.lt.s32.totalorder %s23, 1
      %s319 = scalar_select %p318, %s23, 1
      %s320 = scalar_lea.vmem %s6, %s319
      %s321 = sadd.s32 %s23, %s24
      %p322 = scmp.lt.s32.totalorder %s321, 0
      %s323 = scalar_select %p322, %s321, 0
      %p324 = scmp.lt.s32.totalorder %s323, 0
      %s325 = scalar_select %p324, %s323, 0
      %s326 = smul.addr %s325, 8
      %s327 = scalar_lea.vmem %s2, %s326
      %s328 = sadd.s32 %s23, %s24
      %p329 = scmp.lt.s32.totalorder %s328, 0
      %s330 = scalar_select %p329, %s328, 0
      %s331 = sadd.s32 %s23, %s24
      %p332 = scmp.lt.s32.totalorder %s331, 0
      %s333 = scalar_select %p332, %s331, 0
      %p334 = scmp.lt.s32.totalorder %s333, 0
      %s335 = scalar_select %p334, %s333, 0
      %s336 = scalar_lea.vmem %s3, %s335
      %s337 = sadd.s32 %s23, %s24
      %p338 = scmp.lt.s32.totalorder %s337, 0
      %s339 = scalar_select %p338, %s337, 0
      %s340 = sadd.s32 %s23, %s24
      %p341 = scmp.lt.s32.totalorder %s340, 0
      %s342 = scalar_select %p341, %s340, 0
      %p343 = scmp.lt.s32.totalorder %s342, 0
      %s344 = scalar_select %p343, %s342, 0
      %s345 = smul.addr %s344, 8
      %s346 = scalar_lea.vmem %s5, %s345
      %s347 = sadd.s32 %s23, %s24
      %p348 = scmp.lt.s32.totalorder %s347, 0
      %s349 = scalar_select %p348, %s347, 0
      %p350 = scmp.lt.s32.totalorder %s23, 1
      %s351 = scalar_select %p350, %s23, 1
      %s352 = scalar_lea.vmem %s6, %s351
      %s353 = sadd.s32 %s23, %s24
      %p354 = scmp.eq.s32.totalorder %s24, 0
      // Predicated region
      $region45: #{crisis_adaptive_loss.1} parent=43 // pred_check
        %p355 = pneg %p354
      $region46: #{crisis_adaptive_loss.1} parent=43 // pred_check_branch
        %357 = sbr.rel (%p355) target = $region48
      $region47: #{crisis_adaptive_loss.1} parent=43 // pred_region
        %vm358 = vcmask 0
        %359 = vst.msk [vmem:[%s352] sm:$0x1] %vm358, 0.0
      $region48: #{crisis_adaptive_loss.1} parent=43 // pred_fallthru
        _
      %s360 = sld [smem:[#allocation2]]
      %s361 = sld [smem:[#allocation3]]
      %v362 = vstv %s360
      %v363 = vrcp.pop %v362
      %s364 = vtos %v363
      %v365 = vld [vmem:[%s327] sm:$0x3f]
      %v366 = vld [vmem:[%s336] sm:$0x1]
      %v367 = vld [vmem:[%s4] sm:$0x3f]
      %v368 = vlaneseq
      %v369 = vand.u32 %v368, 127
      %s370 = smul.u32 %s353, 8
      %v371 = vstv %s370
      %v372 = vadd.s32 %v371, %v369
      %vm373 = vcmp.lt.s32.totalorder %v372, 8
      %v374 = vsel %vm373, 1, 0
      %v375 = vcvt.s32.f32 %v374
      %vm376 = vcmp.eq.s32.totalorder %v374, 1
      %v377 = vsel %vm376, %v365, 0.0
      %v378 = vsel %vm373, %v366, 0
      %v379 = vlaneseq
      %v380 = vshrl.u32 %v379, 7
      %v381 = vlaneseq
      %v382 = vshrl.u32 %v381, 7
      %v383 = vsub.s32 0, %v382
      %v384 = vrot.slane %v378, %v383
      %vm385 = vcmp.eq.s32.totalorder %v380, %v384
      %v386 = vsel %vm385, 1, 0
      %v387 = vcvt.s32.f32 %v386
      %v388 = vstv %s364
      %v389 = vmul.f32 %v377, %v388
      %vm390 = vcmask 62464
      %v391 = vsel %vm390, %v389, -inf
      %v392 = vrot.slane %v391, 4
      %v393 = vmax.f32 %v391, %v392
      %v394 = vrot.slane %v393, 2
      %v395 = vmax.f32 %v393, %v394
      %v396 = vrot.slane %v395, 1
      %v397 = vmax.f32 %v395, %v396
      %v398 = vsub.f32 %v389, %v397
      %v399 = vmul.f32 %v398, 1.442695
      %v400 = vpow.pop %v399
      %v401 = vsel %vm390, %v400, 0.0
      %v402 = vrot.slane %v401, 4
      %v403 = vadd.f32 %v401, %v402
      %v404 = vrot.slane %v403, 2
      %v405 = vadd.f32 %v403, %v404
      %v406 = vrot.slane %v405, 1
      %v407 = vadd.f32 %v405, %v406
      %v408 = vlog2.pop %v407
      %v409 = vmul.f32 %v408, 0.6931472
      %v410 = vsub.f32 %v398, %v409
      %v411 = vmul.f32 %v387, %v410
      %v412 = vsel %vm390, %v411, 0.0
      %v413 = vrot.slane %v412, 4
      %v414 = vadd.f32 %v412, %v413
      %v415 = vrot.slane %v414, 2
      %v416 = vadd.f32 %v414, %v415
      %v417 = vrot.slane %v416, 1
      %v418 = vadd.f32 %v416, %v417
      %v419 = vsub.f32 0.0, %v418
      %421 = vset.pattern.permute.xlu0 0
      %422 = vperm.xlu0 %421, %v367
      %v423 = vpop.permute.xlu0 %422
      %v425 = vmul.f32 %v387, %v423
      %v426 = vsel %vm390, %v425, 0.0
      %v427 = vrot.slane %v426, 4
      %v428 = vadd.f32 %v426, %v427
      %v429 = vrot.slane %v428, 2
      %v430 = vadd.f32 %v428, %v429
      %v431 = vrot.slane %v430, 1
      %v432 = vadd.f32 %v430, %v431
      %v433 = vmul.f32 %v419, %v432
      %v434 = vmul.f32 %v433, %v375
      %vm435 = vcmask 57344
      %v436 = vsel %vm435, %v434, 0.0
      %437 = vadd.xlane.f32.xlu0 %v436
      %v438 = vpop.xlane.xlu0 %437
      %v439 = vrot.slane %v438, 4
      %v440 = vadd.f32 %v438, %v439
      %v441 = vrot.slane %v440, 2
      %v442 = vadd.f32 %v440, %v441
      %v443 = vrot.slane %v442, 1
      %v444 = vadd.f32 %v442, %v443
      %s445 = vtos %v444
      %v446 = vstv %s445
      %vm447 = vcmask 60416
      %v448 = vsel %vm447, %v377, 0.0
      %v449 = vrot.slane %v448, 4
      %v450 = vadd.f32 %v448, %v449
      %v451 = vrot.slane %v450, 2
      %v452 = vadd.f32 %v450, %v451
      %v453 = vrot.slane %v452, 1
      %v454 = vadd.f32 %v452, %v453
      %v456 = vrot.slane %v377, 4
      %vm458 = vcmask 58368
      %v459 = vsel %vm458, %v456, 0.0
      %v460 = vrot.slane %v459, 4
      %v461 = vadd.f32 %v459, %v460
      %v462 = vrot.slane %v461, 2
      %v463 = vadd.f32 %v461, %v462
      %v464 = vrot.slane %v463, 1
      %v465 = vadd.f32 %v463, %v464
      %v466 = vsel %vm447, %v387, 0.0
      %v467 = vrot.slane %v466, 4
      %v468 = vadd.f32 %v466, %v467
      %v469 = vrot.slane %v468, 2
      %v470 = vadd.f32 %v468, %v469
      %v471 = vrot.slane %v470, 1
      %v472 = vadd.f32 %v470, %v471
      %v473 = vmax.f32 %v465, %v454
      %v474 = vsub.f32 %v465, %v473
      %v475 = vmul.f32 %v474, 1.442695
      %v476 = vpow.pop %v475
      %v477 = vsub.f32 %v454, %v473
      %v478 = vmul.f32 %v477, 1.442695
      %v479 = vpow.pop %v478
      %v480 = vadd.f32 %v476, %v479
      %v481 = vlog2.pop %v480
      %v482 = vmul.f32 %v481, 0.6931472
      %v483 = vadd.f32 %v473, %v482
      %v484 = vsub.f32 %v454, %v483
      %v485 = vmul.f32 %v472, %v484
      %v486 = vsub.f32 1.0, %v472
      %v487 = vsub.f32 %v465, %v483
      %v488 = vmul.f32 %v486, %v487
      %v489 = vadd.f32 %v485, %v488
      %v490 = vsub.f32 0.0, %v489
      %v491 = vmul.f32 %v490, %v375
      %v492 = vsel %vm435, %v491, 0.0
      %493 = vadd.xlane.f32.xlu0 %v492
      %v494 = vpop.xlane.xlu0 %493
      %v495 = vrot.slane %v494, 4
      %v496 = vadd.f32 %v494, %v495
      %v497 = vrot.slane %v496, 2
      %v498 = vadd.f32 %v496, %v497
      %v499 = vrot.slane %v498, 1
      %v500 = vadd.f32 %v498, %v499
      %s501 = vtos %v500
      %v502 = vstv %s501
      %v503 = vrot.slane %v377, 2
      %v505 = vadd.f32 %v377, %v503
      %v506 = vsub.f32 1.0, %v505
      %v508 = vrot.slane %v387, 2
      %v510 = vadd.f32 %v387, %v508
      %v511 = vmax.f32 %v506, %v505
      %v512 = vsub.f32 %v506, %v511
      %v513 = vmul.f32 %v512, 1.442695
      %v514 = vpow.pop %v513
      %v515 = vsub.f32 %v505, %v511
      %v516 = vmul.f32 %v515, 1.442695
      %v517 = vpow.pop %v516
      %v518 = vadd.f32 %v514, %v517
      %v519 = vlog2.pop %v518
      %v520 = vmul.f32 %v519, 0.6931472
      %v521 = vadd.f32 %v511, %v520
      %v522 = vsub.f32 %v505, %v521
      %v523 = vmul.f32 %v510, %v522
      %v524 = vsub.f32 1.0, %v510
      %v525 = vsub.f32 %v506, %v521
      %v526 = vmul.f32 %v524, %v525
      %v527 = vadd.f32 %v523, %v526
      %v528 = vsub.f32 0.0, %v527
      %v529 = vmul.f32 %v528, %v375
      %v530 = vsel %vm435, %v529, 0.0
      %531 = vadd.xlane.f32.xlu0 %v530
      %v532 = vpop.xlane.xlu0 %531
      %v533 = vrot.slane %v532, 4
      %v534 = vadd.f32 %v532, %v533
      %v535 = vrot.slane %v534, 2
      %v536 = vadd.f32 %v534, %v535
      %v537 = vrot.slane %v536, 1
      %v538 = vadd.f32 %v536, %v537
      %s539 = vtos %v538
      %v540 = vstv %s539
      %v541 = vmul.f32 %v502, 1.2
      %v542 = vadd.f32 %v446, %v541
      %v543 = vmul.f32 %v540, 2.0
      %v544 = vadd.f32 %v542, %v543
      %v545 = vld [vmem:[%s346] sm:$0xff]
      %v546 = vld [vmem:[%s346 + $0x8] sm:$0xff]
      %v547 = vld [vmem:[%s346 + $0x10] sm:$0x3]
      %v548 = vsel %vm376, %v545, 0.0
      %v549 = vsel %vm376, %v546, 0.0
      %v550 = vsel %vm376, %v547, 0.0
      %vm551 = vcmask 64516
      %v552 = vsel %vm551, %v549, -inf
      %v553 = vsel %vm458, %v550, -inf
      %v554 = vmax.f32 %v552, %v553
      %v555 = vrot.slane %v554, 4
      %v556 = vmax.f32 %v554, %v555
      %v557 = vrot.slane %v556, 2
      %v558 = vmax.f32 %v556, %v557
      %v559 = vrot.slane %v558, 1
      %v560 = vmax.f32 %v558, %v559
      %v561 = vsub.f32 %v549, %v560
      %v562 = vsub.f32 %v550, %v560
      %v563 = vmul.f32 %v561, 1.442695
      %v564 = vpow.pop %v563
      %v565 = vmul.f32 %v562, 1.442695
      %v566 = vpow.pop %v565
      %vm569 = vcmask 1043456
      %v570 = vrot.slane %v564, 4
      %v571 = vrot.slane %v566, 4
      %v572 = vsel %vm569, %v570, %v571
      %v574 = vsel %vm390, %v572, 0.0
      %v575 = vrot.slane %v574, 4
      %v576 = vadd.f32 %v574, %v575
      %v577 = vrot.slane %v576, 2
      %v578 = vadd.f32 %v576, %v577
      %v579 = vrot.slane %v578, 1
      %v580 = vadd.f32 %v578, %v579
      %v581 = vlog2.pop %v580
      %v582 = vmul.f32 %v581, 0.6931472
      %v583 = vsub.f32 %v561, %v582
      %v584 = vsub.f32 %v562, %v582
      %v585 = vmul.f32 %v583, 1.442695
      %v586 = vpow.pop %v585
      %v587 = vmul.f32 %v584, 1.442695
      %v588 = vpow.pop %v587
      %v589 = vmul.f32 %v586, %v583
      %v590 = vmul.f32 %v588, %v584
      %v593 = vrot.slane %v589, 4
      %v594 = vrot.slane %v590, 4
      %v595 = vsel %vm569, %v593, %v594
      %v597 = vsel %vm390, %v595, 0.0
      %v598 = vrot.slane %v597, 4
      %v599 = vadd.f32 %v597, %v598
      %v600 = vrot.slane %v599, 2
      %v601 = vadd.f32 %v599, %v600
      %v602 = vrot.slane %v601, 1
      %v603 = vadd.f32 %v601, %v602
      %v604 = vmul.f32 %v603, 2.0
      %v605 = vadd.f32 %v604, 0.0
      %v606 = vadd.f32 %v586, 0.0
      %v607 = vadd.f32 %v588, 0.0
      %vm608 = vcmask 64518
      %v609 = vsel %vm608, %v548, -inf
      %v610 = vsel %vm447, %v549, -inf
      %v611 = vmax.f32 %v609, %v610
      %v612 = vrot.slane %v611, 4
      %v613 = vmax.f32 %v611, %v612
      %v614 = vrot.slane %v613, 2
      %v615 = vmax.f32 %v613, %v614
      %v616 = vrot.slane %v615, 1
      %v617 = vmax.f32 %v615, %v616
      %v618 = vsub.f32 %v548, %v617
      %v619 = vsub.f32 %v549, %v617
      %v620 = vmul.f32 %v618, 1.442695
      %v621 = vpow.pop %v620
      %v622 = vmul.f32 %v619, 1.442695
      %v623 = vpow.pop %v622
      %vm626 = vcmask 1041408
      %v627 = vrot.slane %v621, 6
      %v628 = vrot.slane %v623, 6
      %v629 = vsel %vm626, %v627, %v628
      %v631 = vsel %vm390, %v629, 0.0
      %v632 = vrot.slane %v631, 4
      %v633 = vadd.f32 %v631, %v632
      %v634 = vrot.slane %v633, 2
      %v635 = vadd.f32 %v633, %v634
      %v636 = vrot.slane %v635, 1
      %v637 = vadd.f32 %v635, %v636
      %v638 = vlog2.pop %v637
      %v639 = vmul.f32 %v638, 0.6931472
      %v640 = vsub.f32 %v618, %v639
      %v641 = vsub.f32 %v619, %v639
      %v642 = vmul.f32 %v640, 1.442695
      %v643 = vpow.pop %v642
      %v644 = vmul.f32 %v641, 1.442695
      %v645 = vpow.pop %v644
      %v646 = vmul.f32 %v643, %v640
      %v647 = vmul.f32 %v645, %v641
      %v650 = vrot.slane %v646, 6
      %v651 = vrot.slane %v647, 6
      %v652 = vsel %vm626, %v650, %v651
      %v654 = vsel %vm390, %v652, 0.0
      %v655 = vrot.slane %v654, 4
      %v656 = vadd.f32 %v654, %v655
      %v657 = vrot.slane %v656, 2
      %v658 = vadd.f32 %v656, %v657
      %v659 = vrot.slane %v658, 1
      %v660 = vadd.f32 %v658, %v659
      %v661 = vadd.f32 %v605, %v660
      %v664 = vrot.slane %v606, 6
      %v665 = vrot.slane %v607, 6
      %v666 = vsel %vm626, %v664, %v665
      %v669 = vmul.f32 %v640, %v664
      %v670 = vmul.f32 %v641, %v666
      %v673 = vrot.slane %v669, 6
      %v674 = vrot.slane %v670, 6
      %v675 = vsel %vm626, %v673, %v674
      %v677 = vsel %vm390, %v675, 0.0
      %v678 = vrot.slane %v677, 4
      %v679 = vadd.f32 %v677, %v678
      %v680 = vrot.slane %v679, 2
      %v681 = vadd.f32 %v679, %v680
      %v682 = vrot.slane %v681, 1
      %v683 = vadd.f32 %v681, %v682
      %v684 = vsub.f32 %v661, %v683
      %vm687 = vcmask 1045504
      %v688 = vrot.slane %v643, 2
      %v689 = vrot.slane %v645, 2
      %v690 = vsel %vm687, %v688, %v689
      %v693 = vadd.f32 %v606, %v690
      %v694 = vadd.f32 %v607, %v689
      %v695 = vsel %vm390, %v548, -inf
      %v696 = vrot.slane %v695, 4
      %v697 = vmax.f32 %v695, %v696
      %v698 = vrot.slane %v697, 2
      %v699 = vmax.f32 %v697, %v698
      %v700 = vrot.slane %v699, 1
      %v701 = vmax.f32 %v699, %v700
      %v702 = vsub.f32 %v548, %v701
      %v703 = vmul.f32 %v702, 1.442695
      %v704 = vpow.pop %v703
      %v705 = vsel %vm390, %v704, 0.0
      %v706 = vrot.slane %v705, 4
      %v707 = vadd.f32 %v705, %v706
      %v708 = vrot.slane %v707, 2
      %v709 = vadd.f32 %v707, %v708
      %v710 = vrot.slane %v709, 1
      %v711 = vadd.f32 %v709, %v710
      %v712 = vlog2.pop %v711
      %v713 = vmul.f32 %v712, 0.6931472
      %v714 = vsub.f32 %v702, %v713
      %v717 = vrot.slane %v693, 4
      %v718 = vrot.slane %v694, 4
      %v719 = vsel %vm569, %v717, %v718
      %v721 = vmul.f32 %v714, %v719
      %v722 = vsel %vm390, %v721, 0.0
      %v723 = vrot.slane %v722, 4
      %v724 = vadd.f32 %v722, %v723
      %v725 = vrot.slane %v724, 2
      %v726 = vadd.f32 %v724, %v725
      %v727 = vrot.slane %v726, 1
      %v728 = vadd.f32 %v726, %v727
      %v729 = vsub.f32 %v684, %v728
      %v730 = vmul.f32 %v729, %v375
      %v731 = vsel %vm435, %v730, 0.0
      %732 = vadd.xlane.f32.xlu0 %v731
      %v733 = vpop.xlane.xlu0 %732
      %v734 = vrot.slane %v733, 4
      %v735 = vadd.f32 %v733, %v734
      %v736 = vrot.slane %v735, 2
      %v737 = vadd.f32 %v735, %v736
      %v738 = vrot.slane %v737, 1
      %v739 = vadd.f32 %v737, %v738
      %s740 = vtos %v739
      %v741 = vstv %s740
      %s742 = smul.f32 %s361, 0.033333335
      %v743 = vstv %s742
      %v744 = vmul.f32 %v743, %v741
      %v745 = vsub.f32 %v544, %v744
      %v746 = vld [vmem:[%s352] sm:$0x1]
      %v747 = vadd.f32 %v746, %v745
      %vm748 = vcmask 0
      %749 = vst.msk [vmem:[%s352] sm:$0x1] %vm748, %v747
      %p750 = scmp.lt.s32.totalorder %s23, 1
      %s751 = scalar_select %p750, %s23, 1
      %s752 = scalar_lea.vmem %s6, %s751
      // Predicated region
      $region49: #{crisis_adaptive_loss.1} parent=43 // pred_check
        %p753 = pneg %p208
      $region50: #{crisis_adaptive_loss.1} parent=43 // pred_check_branch
        %755 = sbr.rel (%p753) target = $region52
      $region51: #{crisis_adaptive_loss.1} parent=43 // pred_region
        _
      $region52: #{crisis_adaptive_loss.1} parent=43 // pred_fallthru
        _
    $region44: #{crisis_adaptive_loss.1} parent=5 // pred_fallthru
      _
    %p756 = scmp.le.s32.totalorder 2, %s14
    // Predicated region
    $region53: #{crisis_adaptive_loss.1} parent=5 // pred_check
      %p757 = pneg %p756
    $region54: #{crisis_adaptive_loss.1} parent=5 // pred_check_branch
      %759 = sbr.rel (%p757) target = $region56
    $region55: #{crisis_adaptive_loss.1} parent=5 // pred_region
      %s760 = ssub.s32 %s14, 2
      // Predicated region
      $region57: #{crisis_adaptive_loss.1} parent=55 // pred_check
        %p761 = pneg %p214
      $region58: #{crisis_adaptive_loss.1} parent=55 // pred_check_branch
        %763 = sbr.rel (%p761) target = $region60
      $region59: #{crisis_adaptive_loss.1} parent=55 // pred_region
        %p764 = scmp.lt.s32.totalorder %s25, 1
        %s765 = scalar_select %p764, %s25, 1
        %s766 = scalar_lea.vmem %s6, %s765
      $region60: #{crisis_adaptive_loss.1} parent=55 // pred_fallthru
        _
    $region56: #{crisis_adaptive_loss.1} parent=5 // pred_fallthru
      _
  $region6: #{crisis_adaptive_loss.1} parent=0 // loop_footer
    %s18 = sadd.s32 1, %s14
  $region7: #{crisis_adaptive_loss.1} parent=0 // loop_footer_branch
    %13 = sbr.rel target = $region3
  $region8: #{crisis_adaptive_loss.1} parent=0 // loop_exit
    _

</llo_original>
